<compile_context>
chip_gen: v6e
topology: v6e:2x2x1
jax: 0.10.0
libtpu: 0.0.40
codegen_flags: <defaults>
</compile_context>

<pallas_src>
import jax
import jax.numpy as jnp
import numpy as np
from jax.experimental import pallas as pl
from jax.experimental.pallas import tpu as pltpu


def lstm_fc_kernel(x_ref, wih_ref, whh_ref, b_ref, wfc_ref, bfc_ref, out_ref):
    B, T, I = x_ref.shape
    H = whh_ref.shape[0]

    # Hoisted input projection for every timestep: one (B*T, I) x (I, 4H) MXU matmul
    # plus one bias broadcast.  Kept as a plain value (2 vregs here) — no VMEM scratch
    # round trip.  Collapsing/splitting the leading dims keeps the (8,128) layout.
    x2 = x_ref[...].reshape(B * T, I)
    xw = (jnp.dot(x2, wih_ref[...], preferred_element_type=jnp.float32)
          + b_ref[...]).reshape(B, T, 4 * H)          # gate columns ordered i, f, o, g

    whh = whh_ref[...]                                # (H, 4H), read from VMEM once

    def gate_math(gates, c_prev):
        # Gates are column-ordered (i, f, o, g): ONE sigmoid and ONE tanh over the full
        # (B, 4H) vreg cover all four gates (EUP charges per vreg, not per live lane).
        sig = jax.nn.sigmoid(gates)
        tnh = jnp.tanh(gates)
        i_g = sig[:, 0 * H:1 * H]
        f_g = sig[:, 1 * H:2 * H]
        o_g = sig[:, 2 * H:3 * H]
        g_g = tnh[:, 3 * H:4 * H]
        c_new = f_g * c_prev + i_g * g_g
        h_new = o_g * jnp.tanh(c_new)                 # 3rd (and last) EUP push per step
        return h_new, c_new

    # Peel t = 0: h0 = c0 = 0, so the recurrent matmul and the f*c term vanish.
    g0 = xw[:, 0, :]
    s0 = jax.nn.sigmoid(g0)
    t0 = jnp.tanh(g0)
    c = s0[:, 0 * H:1 * H] * t0[:, 3 * H:4 * H]       # i * g
    h = s0[:, 2 * H:3 * H] * jnp.tanh(c)              # o * tanh(c)

    # Remaining timesteps: only the truly-serial h @ W_hh stays inside the loop.
    # T is small and static -> fully unrolled with static slice indices.
    for t in range(1, T):
        gates = xw[:, t, :] + jnp.dot(h, whh, preferred_element_type=jnp.float32)
        h, c = gate_math(gates, c)

    # Dropout is identity in eval mode; fuse Linear + ReLU on the last hidden state.
    y = jnp.dot(h, wfc_ref[...], preferred_element_type=jnp.float32) + bfc_ref[...]
    out_ref[...] = jnp.maximum(y, 0.0).astype(out_ref.dtype)


def prepare_params(w_ih, w_hh, b_ih, b_hh, w_fc, b_fc):
    """One-time layout prep from native PyTorch parameter layouts.

    w_ih: (4H, I), w_hh: (4H, H), b_*: (4H,)  (nn.LSTM, gate order i, f, g, o)
    w_fc: (O, H),  b_fc: (O,)                 (nn.Linear)

    Returns weights transposed for `act @ W`, LSTM gate columns permuted to
    (i, f, o, g), and the two LSTM biases combined.
    """
    def to_ifog(w):                                   # (..., 4H): i,f,g,o -> i,f,o,g
        i, f, g, o = jnp.split(w, 4, axis=-1)
        return jnp.concatenate([i, f, o, g], axis=-1)

    wih_t = to_ifog(w_ih.T)                           # (I, 4H)
    whh_t = to_ifog(w_hh.T)                           # (H, 4H)
    bias = to_ifog((b_ih + b_hh).reshape(1, -1))      # (1, 4H)
    wfc_t = w_fc.T                                    # (H, O)
    bfc = b_fc.reshape(1, -1)                         # (1, O)
    return wih_t, whh_t, bias, wfc_t, bfc


def lstm_model_forward(x, prepared):
    """Eval-mode forward of LSTMModel.  x: (B, T, I) batch-first, like the module."""
    B, T, _ = x.shape
    wih_t, whh_t, bias, wfc_t, bfc = prepared
    O = wfc_t.shape[1]

    vmem = pl.BlockSpec(memory_space=pltpu.MemorySpace.VMEM)
    return pl.pallas_call(
        lstm_fc_kernel,
        out_shape=jax.ShapeDtypeStruct((B, O), jnp.float32),
        in_specs=[vmem] * 6,
        out_specs=vmem,
    )(x, wih_t, whh_t, bias, wfc_t, bfc)


def reference_forward(x, w_ih, w_hh, b_ih, b_hh, w_fc, b_fc):
    """Pure-JAX reference of the PyTorch forward (eval mode), PyTorch weight layouts."""
    B, T, I = x.shape
    H = w_hh.shape[1]
    h = jnp.zeros((B, H), jnp.float32)
    c = jnp.zeros((B, H), jnp.float32)

    def step(carry, x_t):
        h, c = carry
        gates = x_t @ w_ih.T + h @ w_hh.T + b_ih + b_hh
        i_g = jax.nn.sigmoid(gates[:, 0 * H:1 * H])
        f_g = jax.nn.sigmoid(gates[:, 1 * H:2 * H])
        g_g = jnp.tanh(gates[:, 2 * H:3 * H])
        o_g = jax.nn.sigmoid(gates[:, 3 * H:4 * H])
        c = f_g * c + i_g * g_g
        h = o_g * jnp.tanh(c)
        return (h, c), None

    (h, _), _ = jax.lax.scan(step, (h, c), jnp.transpose(x, (1, 0, 2)))
    y = h @ w_fc.T + b_fc
    return jnp.maximum(y, 0.0)


if __name__ == "__main__":
    B, T, I, H, O = 2, 8, 16, 32, 4

    key = jax.random.PRNGKey(0)
    ks = jax.random.split(key, 7)
    scale = 1.0 / np.sqrt(H)

    # Parameters in native PyTorch layouts (nn.LSTM / nn.Linear defaults).
    w_ih = jax.random.uniform(ks[0], (4 * H, I), jnp.float32, -scale, scale)
    w_hh = jax.random.uniform(ks[1], (4 * H, H), jnp.float32, -scale, scale)
    b_ih = jax.random.uniform(ks[2], (4 * H,), jnp.float32, -scale, scale)
    b_hh = jax.random.uniform(ks[3], (4 * H,), jnp.float32, -scale, scale)
    w_fc = jax.random.uniform(ks[4], (O, H), jnp.float32, -scale, scale)
    b_fc = jax.random.uniform(ks[5], (O,), jnp.float32, -scale, scale)

    x = jax.random.normal(ks[6], (B, T, I), jnp.float32)

    prepared = prepare_params(w_ih, w_hh, b_ih, b_hh, w_fc, b_fc)

    out = jax.block_until_ready(lstm_model_forward(x, prepared))
    ref = jax.block_until_ready(
        reference_forward(x, w_ih, w_hh, b_ih, b_hh, w_fc, b_fc))
    np.testing.assert_allclose(np.asarray(out), np.asarray(ref), rtol=1e-5, atol=1e-5)

    print("KERNEL_OK")
</pallas_src>

<mosaic_0001>
module attributes {stable_mosaic.version = 11 : i64} {
  func.func @lstm_fc_kernel(%arg0: memref<2x8x16xf32, #tpu.memory_space<vmem>>, %arg1: memref<16x128xf32, #tpu.memory_space<vmem>>, %arg2: memref<32x128xf32, #tpu.memory_space<vmem>>, %arg3: memref<1x128xf32, #tpu.memory_space<vmem>>, %arg4: memref<32x4xf32, #tpu.memory_space<vmem>>, %arg5: memref<1x4xf32, #tpu.memory_space<vmem>>, %arg6: memref<2x4xf32, #tpu.memory_space<vmem>>) attributes {dimension_semantics = [], scalar_prefetch = 0 : i64, scratch_operands = 0 : i64, tpu.core_type = #tpu.core_type<tc>} {
    %c0 = arith.constant 0 : index
    %c0_0 = arith.constant 0 : index
    %c0_1 = arith.constant 0 : index
    %0 = vector.load %arg0[%c0, %c0_0, %c0_1] : memref<2x8x16xf32, #tpu.memory_space<vmem>>, vector<2x8x16xf32>
    %1 = vector.shape_cast %0 : vector<2x8x16xf32> to vector<16x16xf32>
    %c0_2 = arith.constant 0 : index
    %c0_3 = arith.constant 0 : index
    %2 = vector.load %arg1[%c0_2, %c0_3] : memref<16x128xf32, #tpu.memory_space<vmem>>, vector<16x128xf32>
    %cst = arith.constant dense<0.000000e+00> : vector<16x128xf32>
    %3 = tpu.matmul %1, %2, %cst {dimension_numbers = #tpu.dot_dimension_numbers<[1], [0], [0], [1], [0, 0, 1, 1], [], []>} : vector<16x16xf32>, vector<16x128xf32>, vector<16x128xf32> -> vector<16x128xf32>
    %c0_4 = arith.constant 0 : index
    %c0_5 = arith.constant 0 : index
    %4 = vector.load %arg3[%c0_4, %c0_5] : memref<1x128xf32, #tpu.memory_space<vmem>>, vector<1x128xf32>
    %5 = vector.broadcast %4 : vector<1x128xf32> to vector<16x128xf32>
    %6 = arith.addf %3, %5 : vector<16x128xf32>
    %7 = vector.shape_cast %6 : vector<16x128xf32> to vector<2x8x128xf32>
    %c0_6 = arith.constant 0 : index
    %c0_7 = arith.constant 0 : index
    %8 = vector.load %arg2[%c0_6, %c0_7] : memref<32x128xf32, #tpu.memory_space<vmem>>, vector<32x128xf32>
    %9 = vector.extract_strided_slice %7 {offsets = [0, 0, 0], sizes = [2, 1, 128], strides = [1, 1, 1]} : vector<2x8x128xf32> to vector<2x1x128xf32>
    %10 = vector.shape_cast %9 : vector<2x1x128xf32> to vector<2x128xf32>
    %11 = arith.negf %10 : vector<2x128xf32>
    %12 = math.exp %11 : vector<2x128xf32>
    %cst_8 = arith.constant 1.000000e+00 : f32
    %13 = vector.broadcast %cst_8 : f32 to vector<2x128xf32>
    %14 = arith.addf %13, %12 : vector<2x128xf32>
    %15 = arith.divf %13, %14 : vector<2x128xf32>
    %16 = math.tanh %10 : vector<2x128xf32>
    %17 = vector.extract_strided_slice %15 {offsets = [0, 0], sizes = [2, 32], strides = [1, 1]} : vector<2x128xf32> to vector<2x32xf32>
    %18 = vector.extract_strided_slice %16 {offsets = [0, 96], sizes = [2, 32], strides = [1, 1]} : vector<2x128xf32> to vector<2x32xf32>
    %19 = arith.mulf %17, %18 : vector<2x32xf32>
    %20 = vector.extract_strided_slice %15 {offsets = [0, 64], sizes = [2, 32], strides = [1, 1]} : vector<2x128xf32> to vector<2x32xf32>
    %21 = math.tanh %19 : vector<2x32xf32>
    %22 = arith.mulf %20, %21 : vector<2x32xf32>
    %23 = vector.extract_strided_slice %7 {offsets = [0, 1, 0], sizes = [2, 1, 128], strides = [1, 1, 1]} : vector<2x8x128xf32> to vector<2x1x128xf32>
    %24 = vector.shape_cast %23 : vector<2x1x128xf32> to vector<2x128xf32>
    %cst_9 = arith.constant dense<0.000000e+00> : vector<2x128xf32>
    %25 = tpu.matmul %22, %8, %cst_9 {dimension_numbers = #tpu.dot_dimension_numbers<[1], [0], [0], [1], [0, 0, 1, 1], [], []>} : vector<2x32xf32>, vector<32x128xf32>, vector<2x128xf32> -> vector<2x128xf32>
    %26 = arith.addf %24, %25 : vector<2x128xf32>
    %27 = arith.negf %26 : vector<2x128xf32>
    %28 = math.exp %27 : vector<2x128xf32>
    %cst_10 = arith.constant 1.000000e+00 : f32
    %29 = vector.broadcast %cst_10 : f32 to vector<2x128xf32>
    %30 = arith.addf %29, %28 : vector<2x128xf32>
    %31 = arith.divf %29, %30 : vector<2x128xf32>
    %32 = math.tanh %26 : vector<2x128xf32>
    %33 = vector.extract_strided_slice %31 {offsets = [0, 0], sizes = [2, 32], strides = [1, 1]} : vector<2x128xf32> to vector<2x32xf32>
    %34 = vector.extract_strided_slice %31 {offsets = [0, 32], sizes = [2, 32], strides = [1, 1]} : vector<2x128xf32> to vector<2x32xf32>
    %35 = vector.extract_strided_slice %31 {offsets = [0, 64], sizes = [2, 32], strides = [1, 1]} : vector<2x128xf32> to vector<2x32xf32>
    %36 = vector.extract_strided_slice %32 {offsets = [0, 96], sizes = [2, 32], strides = [1, 1]} : vector<2x128xf32> to vector<2x32xf32>
    %37 = arith.mulf %34, %19 : vector<2x32xf32>
    %38 = arith.mulf %33, %36 : vector<2x32xf32>
    %39 = arith.addf %37, %38 : vector<2x32xf32>
    %40 = math.tanh %39 : vector<2x32xf32>
    %41 = arith.mulf %35, %40 : vector<2x32xf32>
    %42 = vector.extract_strided_slice %7 {offsets = [0, 2, 0], sizes = [2, 1, 128], strides = [1, 1, 1]} : vector<2x8x128xf32> to vector<2x1x128xf32>
    %43 = vector.shape_cast %42 : vector<2x1x128xf32> to vector<2x128xf32>
    %cst_11 = arith.constant dense<0.000000e+00> : vector<2x128xf32>
    %44 = tpu.matmul %41, %8, %cst_11 {dimension_numbers = #tpu.dot_dimension_numbers<[1], [0], [0], [1], [0, 0, 1, 1], [], []>} : vector<2x32xf32>, vector<32x128xf32>, vector<2x128xf32> -> vector<2x128xf32>
    %45 = arith.addf %43, %44 : vector<2x128xf32>
    %46 = arith.negf %45 : vector<2x128xf32>
    %47 = math.exp %46 : vector<2x128xf32>
    %cst_12 = arith.constant 1.000000e+00 : f32
    %48 = vector.broadcast %cst_12 : f32 to vector<2x128xf32>
    %49 = arith.addf %48, %47 : vector<2x128xf32>
    %50 = arith.divf %48, %49 : vector<2x128xf32>
    %51 = math.tanh %45 : vector<2x128xf32>
    %52 = vector.extract_strided_slice %50 {offsets = [0, 0], sizes = [2, 32], strides = [1, 1]} : vector<2x128xf32> to vector<2x32xf32>
    %53 = vector.extract_strided_slice %50 {offsets = [0, 32], sizes = [2, 32], strides = [1, 1]} : vector<2x128xf32> to vector<2x32xf32>
    %54 = vector.extract_strided_slice %50 {offsets = [0, 64], sizes = [2, 32], strides = [1, 1]} : vector<2x128xf32> to vector<2x32xf32>
    %55 = vector.extract_strided_slice %51 {offsets = [0, 96], sizes = [2, 32], strides = [1, 1]} : vector<2x128xf32> to vector<2x32xf32>
    %56 = arith.mulf %53, %39 : vector<2x32xf32>
    %57 = arith.mulf %52, %55 : vector<2x32xf32>
    %58 = arith.addf %56, %57 : vector<2x32xf32>
    %59 = math.tanh %58 : vector<2x32xf32>
    %60 = arith.mulf %54, %59 : vector<2x32xf32>
    %61 = vector.extract_strided_slice %7 {offsets = [0, 3, 0], sizes = [2, 1, 128], strides = [1, 1, 1]} : vector<2x8x128xf32> to vector<2x1x128xf32>
    %62 = vector.shape_cast %61 : vector<2x1x128xf32> to vector<2x128xf32>
    %cst_13 = arith.constant dense<0.000000e+00> : vector<2x128xf32>
    %63 = tpu.matmul %60, %8, %cst_13 {dimension_numbers = #tpu.dot_dimension_numbers<[1], [0], [0], [1], [0, 0, 1, 1], [], []>} : vector<2x32xf32>, vector<32x128xf32>, vector<2x128xf32> -> vector<2x128xf32>
    %64 = arith.addf %62, %63 : vector<2x128xf32>
    %65 = arith.negf %64 : vector<2x128xf32>
    %66 = math.exp %65 : vector<2x128xf32>
    %cst_14 = arith.constant 1.000000e+00 : f32
    %67 = vector.broadcast %cst_14 : f32 to vector<2x128xf32>
    %68 = arith.addf %67, %66 : vector<2x128xf32>
    %69 = arith.divf %67, %68 : vector<2x128xf32>
    %70 = math.tanh %64 : vector<2x128xf32>
    %71 = vector.extract_strided_slice %69 {offsets = [0, 0], sizes = [2, 32], strides = [1, 1]} : vector<2x128xf32> to vector<2x32xf32>
    %72 = vector.extract_strided_slice %69 {offsets = [0, 32], sizes = [2, 32], strides = [1, 1]} : vector<2x128xf32> to vector<2x32xf32>
    %73 = vector.extract_strided_slice %69 {offsets = [0, 64], sizes = [2, 32], strides = [1, 1]} : vector<2x128xf32> to vector<2x32xf32>
    %74 = vector.extract_strided_slice %70 {offsets = [0, 96], sizes = [2, 32], strides = [1, 1]} : vector<2x128xf32> to vector<2x32xf32>
    %75 = arith.mulf %72, %58 : vector<2x32xf32>
    %76 = arith.mulf %71, %74 : vector<2x32xf32>
    %77 = arith.addf %75, %76 : vector<2x32xf32>
    %78 = math.tanh %77 : vector<2x32xf32>
    %79 = arith.mulf %73, %78 : vector<2x32xf32>
    %80 = vector.extract_strided_slice %7 {offsets = [0, 4, 0], sizes = [2, 1, 128], strides = [1, 1, 1]} : vector<2x8x128xf32> to vector<2x1x128xf32>
    %81 = vector.shape_cast %80 : vector<2x1x128xf32> to vector<2x128xf32>
    %cst_15 = arith.constant dense<0.000000e+00> : vector<2x128xf32>
    %82 = tpu.matmul %79, %8, %cst_15 {dimension_numbers = #tpu.dot_dimension_numbers<[1], [0], [0], [1], [0, 0, 1, 1], [], []>} : vector<2x32xf32>, vector<32x128xf32>, vector<2x128xf32> -> vector<2x128xf32>
    %83 = arith.addf %81, %82 : vector<2x128xf32>
    %84 = arith.negf %83 : vector<2x128xf32>
    %85 = math.exp %84 : vector<2x128xf32>
    %cst_16 = arith.constant 1.000000e+00 : f32
    %86 = vector.broadcast %cst_16 : f32 to vector<2x128xf32>
    %87 = arith.addf %86, %85 : vector<2x128xf32>
    %88 = arith.divf %86, %87 : vector<2x128xf32>
    %89 = math.tanh %83 : vector<2x128xf32>
    %90 = vector.extract_strided_slice %88 {offsets = [0, 0], sizes = [2, 32], strides = [1, 1]} : vector<2x128xf32> to vector<2x32xf32>
    %91 = vector.extract_strided_slice %88 {offsets = [0, 32], sizes = [2, 32], strides = [1, 1]} : vector<2x128xf32> to vector<2x32xf32>
    %92 = vector.extract_strided_slice %88 {offsets = [0, 64], sizes = [2, 32], strides = [1, 1]} : vector<2x128xf32> to vector<2x32xf32>
    %93 = vector.extract_strided_slice %89 {offsets = [0, 96], sizes = [2, 32], strides = [1, 1]} : vector<2x128xf32> to vector<2x32xf32>
    %94 = arith.mulf %91, %77 : vector<2x32xf32>
    %95 = arith.mulf %90, %93 : vector<2x32xf32>
    %96 = arith.addf %94, %95 : vector<2x32xf32>
    %97 = math.tanh %96 : vector<2x32xf32>
    %98 = arith.mulf %92, %97 : vector<2x32xf32>
    %99 = vector.extract_strided_slice %7 {offsets = [0, 5, 0], sizes = [2, 1, 128], strides = [1, 1, 1]} : vector<2x8x128xf32> to vector<2x1x128xf32>
    %100 = vector.shape_cast %99 : vector<2x1x128xf32> to vector<2x128xf32>
    %cst_17 = arith.constant dense<0.000000e+00> : vector<2x128xf32>
    %101 = tpu.matmul %98, %8, %cst_17 {dimension_numbers = #tpu.dot_dimension_numbers<[1], [0], [0], [1], [0, 0, 1, 1], [], []>} : vector<2x32xf32>, vector<32x128xf32>, vector<2x128xf32> -> vector<2x128xf32>
    %102 = arith.addf %100, %101 : vector<2x128xf32>
    %103 = arith.negf %102 : vector<2x128xf32>
    %104 = math.exp %103 : vector<2x128xf32>
    %cst_18 = arith.constant 1.000000e+00 : f32
    %105 = vector.broadcast %cst_18 : f32 to vector<2x128xf32>
    %106 = arith.addf %105, %104 : vector<2x128xf32>
    %107 = arith.divf %105, %106 : vector<2x128xf32>
    %108 = math.tanh %102 : vector<2x128xf32>
    %109 = vector.extract_strided_slice %107 {offsets = [0, 0], sizes = [2, 32], strides = [1, 1]} : vector<2x128xf32> to vector<2x32xf32>
    %110 = vector.extract_strided_slice %107 {offsets = [0, 32], sizes = [2, 32], strides = [1, 1]} : vector<2x128xf32> to vector<2x32xf32>
    %111 = vector.extract_strided_slice %107 {offsets = [0, 64], sizes = [2, 32], strides = [1, 1]} : vector<2x128xf32> to vector<2x32xf32>
    %112 = vector.extract_strided_slice %108 {offsets = [0, 96], sizes = [2, 32], strides = [1, 1]} : vector<2x128xf32> to vector<2x32xf32>
    %113 = arith.mulf %110, %96 : vector<2x32xf32>
    %114 = arith.mulf %109, %112 : vector<2x32xf32>
    %115 = arith.addf %113, %114 : vector<2x32xf32>
    %116 = math.tanh %115 : vector<2x32xf32>
    %117 = arith.mulf %111, %116 : vector<2x32xf32>
    %118 = vector.extract_strided_slice %7 {offsets = [0, 6, 0], sizes = [2, 1, 128], strides = [1, 1, 1]} : vector<2x8x128xf32> to vector<2x1x128xf32>
    %119 = vector.shape_cast %118 : vector<2x1x128xf32> to vector<2x128xf32>
    %cst_19 = arith.constant dense<0.000000e+00> : vector<2x128xf32>
    %120 = tpu.matmul %117, %8, %cst_19 {dimension_numbers = #tpu.dot_dimension_numbers<[1], [0], [0], [1], [0, 0, 1, 1], [], []>} : vector<2x32xf32>, vector<32x128xf32>, vector<2x128xf32> -> vector<2x128xf32>
    %121 = arith.addf %119, %120 : vector<2x128xf32>
    %122 = arith.negf %121 : vector<2x128xf32>
    %123 = math.exp %122 : vector<2x128xf32>
    %cst_20 = arith.constant 1.000000e+00 : f32
    %124 = vector.broadcast %cst_20 : f32 to vector<2x128xf32>
    %125 = arith.addf %124, %123 : vector<2x128xf32>
    %126 = arith.divf %124, %125 : vector<2x128xf32>
    %127 = math.tanh %121 : vector<2x128xf32>
    %128 = vector.extract_strided_slice %126 {offsets = [0, 0], sizes = [2, 32], strides = [1, 1]} : vector<2x128xf32> to vector<2x32xf32>
    %129 = vector.extract_strided_slice %126 {offsets = [0, 32], sizes = [2, 32], strides = [1, 1]} : vector<2x128xf32> to vector<2x32xf32>
    %130 = vector.extract_strided_slice %126 {offsets = [0, 64], sizes = [2, 32], strides = [1, 1]} : vector<2x128xf32> to vector<2x32xf32>
    %131 = vector.extract_strided_slice %127 {offsets = [0, 96], sizes = [2, 32], strides = [1, 1]} : vector<2x128xf32> to vector<2x32xf32>
    %132 = arith.mulf %129, %115 : vector<2x32xf32>
    %133 = arith.mulf %128, %131 : vector<2x32xf32>
    %134 = arith.addf %132, %133 : vector<2x32xf32>
    %135 = math.tanh %134 : vector<2x32xf32>
    %136 = arith.mulf %130, %135 : vector<2x32xf32>
    %137 = vector.extract_strided_slice %7 {offsets = [0, 7, 0], sizes = [2, 1, 128], strides = [1, 1, 1]} : vector<2x8x128xf32> to vector<2x1x128xf32>
    %138 = vector.shape_cast %137 : vector<2x1x128xf32> to vector<2x128xf32>
    %cst_21 = arith.constant dense<0.000000e+00> : vector<2x128xf32>
    %139 = tpu.matmul %136, %8, %cst_21 {dimension_numbers = #tpu.dot_dimension_numbers<[1], [0], [0], [1], [0, 0, 1, 1], [], []>} : vector<2x32xf32>, vector<32x128xf32>, vector<2x128xf32> -> vector<2x128xf32>
    %140 = arith.addf %138, %139 : vector<2x128xf32>
    %141 = arith.negf %140 : vector<2x128xf32>
    %142 = math.exp %141 : vector<2x128xf32>
    %cst_22 = arith.constant 1.000000e+00 : f32
    %143 = vector.broadcast %cst_22 : f32 to vector<2x128xf32>
    %144 = arith.addf %143, %142 : vector<2x128xf32>
    %145 = arith.divf %143, %144 : vector<2x128xf32>
    %146 = math.tanh %140 : vector<2x128xf32>
    %147 = vector.extract_strided_slice %145 {offsets = [0, 0], sizes = [2, 32], strides = [1, 1]} : vector<2x128xf32> to vector<2x32xf32>
    %148 = vector.extract_strided_slice %145 {offsets = [0, 32], sizes = [2, 32], strides = [1, 1]} : vector<2x128xf32> to vector<2x32xf32>
    %149 = vector.extract_strided_slice %145 {offsets = [0, 64], sizes = [2, 32], strides = [1, 1]} : vector<2x128xf32> to vector<2x32xf32>
    %150 = vector.extract_strided_slice %146 {offsets = [0, 96], sizes = [2, 32], strides = [1, 1]} : vector<2x128xf32> to vector<2x32xf32>
    %151 = arith.mulf %148, %134 : vector<2x32xf32>
    %152 = arith.mulf %147, %150 : vector<2x32xf32>
    %153 = arith.addf %151, %152 : vector<2x32xf32>
    %154 = math.tanh %153 : vector<2x32xf32>
    %155 = arith.mulf %149, %154 : vector<2x32xf32>
    %c0_23 = arith.constant 0 : index
    %c0_24 = arith.constant 0 : index
    %156 = vector.load %arg4[%c0_23, %c0_24] : memref<32x4xf32, #tpu.memory_space<vmem>>, vector<32x4xf32>
    %cst_25 = arith.constant dense<0.000000e+00> : vector<2x4xf32>
    %157 = tpu.matmul %155, %156, %cst_25 {dimension_numbers = #tpu.dot_dimension_numbers<[1], [0], [0], [1], [0, 0, 1, 1], [], []>} : vector<2x32xf32>, vector<32x4xf32>, vector<2x4xf32> -> vector<2x4xf32>
    %c0_26 = arith.constant 0 : index
    %c0_27 = arith.constant 0 : index
    %158 = vector.load %arg5[%c0_26, %c0_27] : memref<1x4xf32, #tpu.memory_space<vmem>>, vector<1x4xf32>
    %159 = vector.broadcast %158 : vector<1x4xf32> to vector<2x4xf32>
    %160 = arith.addf %157, %159 : vector<2x4xf32>
    %cst_28 = arith.constant 0.000000e+00 : f32
    %161 = vector.broadcast %cst_28 : f32 to vector<2x4xf32>
    %162 = arith.maximumf %160, %161 : vector<2x4xf32>
    %c0_29 = arith.constant 0 : index
    %c0_30 = arith.constant 0 : index
    %163 = vector.load %arg6[%c0_29, %c0_30] : memref<2x4xf32, #tpu.memory_space<vmem>>, vector<2x4xf32>
    tpu.vector_store %arg6[%c0_29, %c0_30], %162 {strides = array<i32>} : memref<2x4xf32, #tpu.memory_space<vmem>>, vector<2x4xf32>,
    return
  }
}

</mosaic_0001>

<llo_original>
// kernel: tpu_custom_call.1
$region0: #{tpu_custom_call.1}
  #allocation0 [shape = 'u32[]', space=smem, size = 0x4, offset = 0x4, fixed_abs, tag = 'smem constant byte address 0x4 - core index']
  #allocation1 [shape = 'u32[144,128]{1,0:T(1,128)}', space=vmem, size = 0x12000, scoped, tag = 'internal scratch']
  %s0 = inlined_call_operand.hbm [shape: f32[2,8,16], index: 0, kind: input, shape index: {}]
  %s1 = inlined_call_operand.hbm [shape: f32[16,128], index: 1, kind: input, shape index: {}]
  %s2 = inlined_call_operand.vmem [shape: f32[32,128], index: 2, kind: input, shape index: {}]
  %s3 = inlined_call_operand.vmem [shape: f32[1,128], index: 3, kind: input, shape index: {}]
  %s4 = inlined_call_operand.vmem [shape: f32[32,4], index: 4, kind: input, shape index: {}]
  %s5 = inlined_call_operand.vmem [shape: f32[1,4], index: 5, kind: input, shape index: {}]
  %s6 = inlined_call_operand.hbm [shape: f32[2,4], index: 6, kind: output, shape index: {}]
  %s7 = sld [smem:[#allocation0]]
  $region42: #{tpu_custom_call.1} parent=0
    _
  %s9 = ssub.s32 1, %s7
  %s10 = scalar_select 0, %s9, %s7
  $region1: #{tpu_custom_call.1} parent=0
    #allocation2 [shape = 'u8[8192]{0}', space=vmem, size = 0x2000, scoped, tag = 'input window, operand 0, single buffered']
    #allocation3 [shape = 's32[1]{0}', space=sflag, size = 0x4, scoped, tag = 'scoped memory for tpu_custom_call.1']
    #allocation4 [shape = 's32[1]{0}', space=sflag, size = 0x4, scoped, tag = 'scoped memory for tpu_custom_call.1']
    #allocation5 [shape = 'u8[8192]{0}', space=vmem, size = 0x2000, scoped, tag = 'input window, operand 1, single buffered']
    #allocation6 [shape = 's32[1]{0}', space=sflag, size = 0x4, scoped, tag = 'scoped memory for tpu_custom_call.1']
    #allocation7 [shape = 'u8[1024]{0}', space=vmem, size = 0x400, scoped, tag = 'output window, operand 0, single buffered']
    %11 = vsyncpa [#allocation3], 0
    %12 = vsyncpa [#allocation6], 0
    %13 = vsyncpa [#allocation4], 0
    // Predicated region
    $region2: #{tpu_custom_call.1} parent=1 // pred_check
      _
    $region3: #{tpu_custom_call.1} parent=1 // pred_check_branch
      %15 = sbr.rel (0) target = $region5
    $region4: #{tpu_custom_call.1} parent=1 // pred_region
      %s17 = ssub.s32 256, 256
      %18 = vsyncadd [#allocation3], %s17
      %s19 = sshll.u32 [#allocation2], 4
      %s20 = int_to_ptr.vmem [resolvable:$true] %s19
      %25 = dma.hbm_to_vmem [thread:$0]  %s0, 256, %s20, [#allocation3], 128, 128, 8
    $region5: #{tpu_custom_call.1} parent=1 // pred_fallthru
      _
    // Predicated region
    $region6: #{tpu_custom_call.1} parent=1 // pred_check
      _
    $region7: #{tpu_custom_call.1} parent=1 // pred_check_branch
      %27 = sbr.rel (0) target = $region9
    $region8: #{tpu_custom_call.1} parent=1 // pred_region
      %s29 = ssub.s32 256, 256
      %30 = vsyncadd [#allocation6], %s29
      %s31 = sshll.u32 [#allocation5], 4
      %s32 = int_to_ptr.vmem [resolvable:$true] %s31
      %37 = dma.hbm_to_vmem [thread:$0]  %s1, 256, %s32, [#allocation6], 128, 128, 8
    $region9: #{tpu_custom_call.1} parent=1 // pred_fallthru
      _
    // Predicated region
    $region10: #{tpu_custom_call.1} parent=1 // pred_check
      _
    $region11: #{tpu_custom_call.1} parent=1 // pred_check_branch
      %39 = sbr.rel (0) target = $region13
    $region12: #{tpu_custom_call.1} parent=1 // pred_region
      _
    $region13: #{tpu_custom_call.1} parent=1 // pred_fallthru
      _
    // Predicated region
    $region14: #{tpu_custom_call.1} parent=1 // pred_check
      _
    $region15: #{tpu_custom_call.1} parent=1 // pred_check_branch
      %41 = sbr.rel (0) target = $region17
    $region16: #{tpu_custom_call.1} parent=1 // pred_region
      _
    $region17: #{tpu_custom_call.1} parent=1 // pred_fallthru
      _
    // Predicated region
    $region18: #{tpu_custom_call.1} parent=1 // pred_check
      _
    $region19: #{tpu_custom_call.1} parent=1 // pred_check_branch
      %43 = sbr.rel (0) target = $region21
    $region20: #{tpu_custom_call.1} parent=1 // pred_region
      _
    $region21: #{tpu_custom_call.1} parent=1 // pred_fallthru
      _
    // Predicated region
    $region22: #{tpu_custom_call.1} parent=1 // pred_check
      _
    $region23: #{tpu_custom_call.1} parent=1 // pred_check_branch
      %45 = sbr.rel (0) target = $region25
    $region24: #{tpu_custom_call.1} parent=1 // pred_region
      _
    $region25: #{tpu_custom_call.1} parent=1 // pred_fallthru
      _
    // Predicated region
    $region26: #{tpu_custom_call.1} parent=1 // pred_check
      _
    $region27: #{tpu_custom_call.1} parent=1 // pred_check_branch
      %47 = sbr.rel (0) target = $region29
    $region28: #{tpu_custom_call.1} parent=1 // pred_region
      %48 = dma.done [#allocation3], 256
    $region29: #{tpu_custom_call.1} parent=1 // pred_fallthru
      _
    // Predicated region
    $region30: #{tpu_custom_call.1} parent=1 // pred_check
      _
    $region31: #{tpu_custom_call.1} parent=1 // pred_check_branch
      %50 = sbr.rel (0) target = $region33
    $region32: #{tpu_custom_call.1} parent=1 // pred_region
      %51 = dma.done [#allocation6], 256
    $region33: #{tpu_custom_call.1} parent=1 // pred_fallthru
      _
    %v52 = vld [vmem:[#allocation2] sm:$0xff]
    %v53 = vld [vmem:[#allocation2 + $0x8] sm:$0xff]
    %v54 = vld [vmem:[#allocation5] sm:$0xff]
    %v55 = vld [vmem:[#allocation5 + $0x8] sm:$0xff]
    %v56 = vld [vmem:[%s3] sm:$0x1]
    %v58 = vlaneseq
    %v59 = vshrl.u32 %v58, 7
    %v60 = vsub.s32 0, %v59
    %v61 = vrot.slane %v56, %v60
    %vm63 = vcmask 130048
    %v65 = vsel %vm63, %v52, 0
    %v68 = vsel %vm63, %v53, 0
    %70 = vmatprep.subr.mxu0 0.0
    %71 = vmatpush1.msra.mxu0 0.0
    %72 = vmatprep.subr.mxu0 0.0
    %73 = vmatpush1.msra.mxu0 0.0
    %74 = vmatprep.subr.mxu0 0.0
    %75 = vmatpush1.msra.mxu0 0.0
    %76 = vmatprep.subr.mxu0 0.0
    %77 = vmatpush1.msra.mxu0 0.0
    %78 = vmatprep.subr.mxu0 0.0
    %79 = vmatpush1.msra.mxu0 0.0
    %80 = vmatprep.subr.mxu0 0.0
    %81 = vmatpush1.msra.mxu0 0.0
    %82 = vmatprep.subr.mxu0 0.0
    %83 = vmatpush1.msra.mxu0 0.0
    %84 = vmatprep.subr.mxu0 0.0
    %85 = vmatpush1.msra.mxu0 0.0
    %86 = vmatprep.subr.mxu0 0.0
    %87 = vmatpush1.msra.mxu0 0.0
    %88 = vmatprep.subr.mxu0 0.0
    %89 = vmatpush1.msra.mxu0 0.0
    %90 = vmatprep.subr.mxu0 0.0
    %91 = vmatpush1.msra.mxu0 0.0
    %92 = vmatprep.subr.mxu0 0.0
    %93 = vmatpush1.msra.mxu0 0.0
    %94 = vmatprep.subr.mxu0 0.0
    %95 = vmatpush1.msra.mxu0 0.0
    %96 = vmatprep.subr.mxu0 0.0
    %97 = vmatpush1.msra.mxu0 0.0
    %98 = vmatprep.subr.mxu0 0.0
    %99 = vmatpush1.msra.mxu0 %v55
    %100 = vmatprep.subr.mxu0 0.0
    %101 = vmatpush1.msra.mxu0 %v54
    %102 = vmatprep.subr.mxu0 0.0
    %103 = vmatpush2.msra.mxu0 0.0
    %104 = vmatprep.subr.mxu0 0.0
    %105 = vmatpush2.msra.mxu0 0.0
    %106 = vmatprep.subr.mxu0 0.0
    %107 = vmatpush2.msra.mxu0 0.0
    %108 = vmatprep.subr.mxu0 0.0
    %109 = vmatpush2.msra.mxu0 0.0
    %110 = vmatprep.subr.mxu0 0.0
    %111 = vmatpush2.msra.mxu0 0.0
    %112 = vmatprep.subr.mxu0 0.0
    %113 = vmatpush2.msra.mxu0 0.0
    %114 = vmatprep.subr.mxu0 0.0
    %115 = vmatpush2.msra.mxu0 0.0
    %116 = vmatprep.subr.mxu0 0.0
    %117 = vmatpush2.msra.mxu0 0.0
    %118 = vmatprep.subr.mxu0 0.0
    %119 = vmatpush2.msra.mxu0 0.0
    %120 = vmatprep.subr.mxu0 0.0
    %121 = vmatpush2.msra.mxu0 0.0
    %122 = vmatprep.subr.mxu0 0.0
    %123 = vmatpush2.msra.mxu0 0.0
    %124 = vmatprep.subr.mxu0 0.0
    %125 = vmatpush2.msra.mxu0 0.0
    %126 = vmatprep.subr.mxu0 0.0
    %127 = vmatpush2.msra.mxu0 0.0
    %128 = vmatprep.subr.mxu0 0.0
    %129 = vmatpush2.msra.mxu0 0.0
    %130 = vmatprep.subr.mxu0 0.0
    %131 = vmatpush2.msra.mxu0 0.0
    %132 = vmatprep.subr.mxu0 0.0
    %133 = vmatpush2.msra.mxu0 0.0
    %134 = vmatprep.mubr.f32.mxu0 0.0
    %135 = vmatmul.mubr.f32.gmra.mxu0 %v65
    %v136 = vpop.f32.mrf.mxu0
    %v137 = vadd.f32 %v61, %v136
    %v138 = vpop.f32.mrf.mxu0
    %139 = vmatprep.mubr.f32.mxu0 0.0
    %140 = vmatmul.mubr.f32.gmra.mxu0 %v68
    %v141 = vpop.f32.mrf.mxu0
    %v142 = vadd.f32 %v61, %v141
    %v143 = vpop.f32.mrf.mxu0
    %144 = vdwg.mxu0
    %v145 = vld [vmem:[%s2] sm:$0xff]
    %v146 = vld [vmem:[%s2 + $0x8] sm:$0xff]
    %v147 = vld [vmem:[%s2 + $0x10] sm:$0xff]
    %v148 = vld [vmem:[%s2 + $0x18] sm:$0xff]
    %v149 = vxor.u32 %v137, 2147483648
    %v150 = vxor.u32 %v142, 2147483648
    %v151 = vmul.f32 %v149, 1.442695
    %v152 = vpow.pop %v151
    %v153 = vmul.f32 %v150, 1.442695
    %v154 = vpow.pop %v153
    %v155 = vadd.f32 %v152, 1.0
    %v156 = vadd.f32 %v154, 1.0
    %v157 = vrcp.pop %v155
    %v158 = vmul.f32 1.0, %v157
    %v159 = vrcp.pop %v156
    %v160 = vmul.f32 1.0, %v159
    %v161 = vtanh.pop %v137
    %v162 = vtanh.pop %v142
    %165 = vrot.lane.b32.xlu0 %v161, 32
    %v166 = vpop.permute.xlu0 %165
    %167 = vrot.lane.b32.xlu0 %v162, 32
    %v168 = vpop.permute.xlu0 %167
    %v171 = vmul.f32 %v158, %v166
    %v172 = vmul.f32 %v160, %v168
    %v173 = vtanh.pop %v171
    %v174 = vtanh.pop %v172
    %177 = vrot.lane.b32.xlu0 %v173, 64
    %v178 = vpop.permute.xlu0 %177
    %179 = vrot.lane.b32.xlu0 %v174, 64
    %v180 = vpop.permute.xlu0 %179
    %v183 = vmul.f32 %v158, %v178
    %v184 = vmul.f32 %v160, %v180
    %v187 = vrot.slane %v184, 7
    %vm188 = vcmask 1041409
    %v189 = vsel %vm188, %v187, %v183
    %190 = vrot.lane.b32.xlu0 %v189, 64
    %v191 = vpop.permute.xlu0 %190
    %vm192 = vcmask 261120
    %v193 = vsel %vm192, %v191, 0
    %195 = vmatprep.subr.mxu0 0.0
    %196 = vmatpush1.msra.mxu0 0.0
    %197 = vmatprep.subr.mxu0 0.0
    %198 = vmatpush1.msra.mxu0 0.0
    %199 = vmatprep.subr.mxu0 0.0
    %200 = vmatpush1.msra.mxu0 0.0
    %201 = vmatprep.subr.mxu0 0.0
    %202 = vmatpush1.msra.mxu0 0.0
    %203 = vmatprep.subr.mxu0 0.0
    %204 = vmatpush1.msra.mxu0 0.0
    %205 = vmatprep.subr.mxu0 0.0
    %206 = vmatpush1.msra.mxu0 0.0
    %207 = vmatprep.subr.mxu0 0.0
    %208 = vmatpush1.msra.mxu0 0.0
    %209 = vmatprep.subr.mxu0 0.0
    %210 = vmatpush1.msra.mxu0 0.0
    %211 = vmatprep.subr.mxu0 0.0
    %212 = vmatpush1.msra.mxu0 0.0
    %213 = vmatprep.subr.mxu0 0.0
    %214 = vmatpush1.msra.mxu0 0.0
    %215 = vmatprep.subr.mxu0 0.0
    %216 = vmatpush1.msra.mxu0 0.0
    %217 = vmatprep.subr.mxu0 0.0
    %218 = vmatpush1.msra.mxu0 0.0
    %219 = vmatprep.subr.mxu0 0.0
    %220 = vmatpush1.msra.mxu0 %v148
    %221 = vmatprep.subr.mxu0 0.0
    %222 = vmatpush1.msra.mxu0 %v147
    %223 = vmatprep.subr.mxu0 0.0
    %224 = vmatpush1.msra.mxu0 %v146
    %225 = vmatprep.subr.mxu0 0.0
    %226 = vmatpush1.msra.mxu0 %v145
    %227 = vmatprep.subr.mxu0 0.0
    %228 = vmatpush2.msra.mxu0 0.0
    %229 = vmatprep.subr.mxu0 0.0
    %230 = vmatpush2.msra.mxu0 0.0
    %231 = vmatprep.subr.mxu0 0.0
    %232 = vmatpush2.msra.mxu0 0.0
    %233 = vmatprep.subr.mxu0 0.0
    %234 = vmatpush2.msra.mxu0 0.0
    %235 = vmatprep.subr.mxu0 0.0
    %236 = vmatpush2.msra.mxu0 0.0
    %237 = vmatprep.subr.mxu0 0.0
    %238 = vmatpush2.msra.mxu0 0.0
    %239 = vmatprep.subr.mxu0 0.0
    %240 = vmatpush2.msra.mxu0 0.0
    %241 = vmatprep.subr.mxu0 0.0
    %242 = vmatpush2.msra.mxu0 0.0
    %243 = vmatprep.subr.mxu0 0.0
    %244 = vmatpush2.msra.mxu0 0.0
    %245 = vmatprep.subr.mxu0 0.0
    %246 = vmatpush2.msra.mxu0 0.0
    %247 = vmatprep.subr.mxu0 0.0
    %248 = vmatpush2.msra.mxu0 0.0
    %249 = vmatprep.subr.mxu0 0.0
    %250 = vmatpush2.msra.mxu0 0.0
    %251 = vmatprep.subr.mxu0 0.0
    %252 = vmatpush2.msra.mxu0 0.0
    %253 = vmatprep.subr.mxu0 0.0
    %254 = vmatpush2.msra.mxu0 0.0
    %255 = vmatprep.subr.mxu0 0.0
    %256 = vmatpush2.msra.mxu0 0.0
    %257 = vmatprep.subr.mxu0 0.0
    %258 = vmatpush2.msra.mxu0 0.0
    %259 = vmatprep.mubr.f32.mxu0 0.0
    %260 = vmatmul.mubr.f32.gmra.mxu0 %v193
    %v261 = vpop.f32.mrf.mxu0
    %v262 = vadd.f32 0.0, %v261
    %v263 = vpop.f32.mrf.mxu0
    %264 = vdwg.mxu0
    %v266 = vrot.slane %v262, 7
    %v269 = vadd.f32 %v137, %v266
    %v270 = vadd.f32 %v142, %v262
    %v271 = vxor.u32 %v269, 2147483648
    %v272 = vxor.u32 %v270, 2147483648
    %v273 = vmul.f32 %v271, 1.442695
    %v274 = vpow.pop %v273
    %v275 = vmul.f32 %v272, 1.442695
    %v276 = vpow.pop %v275
    %v277 = vadd.f32 %v274, 1.0
    %v278 = vadd.f32 %v276, 1.0
    %v279 = vrcp.pop %v277
    %v280 = vmul.f32 1.0, %v279
    %v281 = vrcp.pop %v278
    %v282 = vmul.f32 1.0, %v281
    %v283 = vtanh.pop %v269
    %v284 = vtanh.pop %v270
    %v287 = vrot.slane %v171, 7
    %v288 = vrot.slane %v172, 7
    %289 = vrot.lane.b32.xlu0 %v287, 32
    %v290 = vpop.permute.xlu0 %289
    %291 = vrot.lane.b32.xlu0 %v288, 32
    %v292 = vpop.permute.xlu0 %291
    %v295 = vmul.f32 %v280, %v290
    %v296 = vmul.f32 %v282, %v292
    %299 = vrot.lane.b32.xlu0 %v283, 32
    %v300 = vpop.permute.xlu0 %299
    %301 = vrot.lane.b32.xlu0 %v284, 32
    %v302 = vpop.permute.xlu0 %301
    %v305 = vmul.f32 %v280, %v300
    %v306 = vmul.f32 %v282, %v302
    %309 = vrot.lane.b32.xlu0 %v305, 32
    %v310 = vpop.permute.xlu0 %309
    %311 = vrot.lane.b32.xlu0 %v306, 32
    %v312 = vpop.permute.xlu0 %311
    %v315 = vadd.f32 %v295, %v310
    %v316 = vadd.f32 %v296, %v312
    %v317 = vtanh.pop %v315
    %v318 = vtanh.pop %v316
    %321 = vrot.lane.b32.xlu0 %v317, 32
    %v322 = vpop.permute.xlu0 %321
    %323 = vrot.lane.b32.xlu0 %v318, 32
    %v324 = vpop.permute.xlu0 %323
    %v327 = vmul.f32 %v280, %v322
    %v328 = vmul.f32 %v282, %v324
    %v331 = vrot.slane %v327, 1
    %v332 = vsel %vm188, %v328, %v331
    %333 = vrot.lane.b32.xlu0 %v332, 64
    %v334 = vpop.permute.xlu0 %333
    %v335 = vsel %vm192, %v334, 0
    %337 = vmatprep.subr.mxu0 0.0
    %338 = vmatpush1.msra.mxu0 0.0
    %339 = vmatprep.subr.mxu0 0.0
    %340 = vmatpush1.msra.mxu0 0.0
    %341 = vmatprep.subr.mxu0 0.0
    %342 = vmatpush1.msra.mxu0 0.0
    %343 = vmatprep.subr.mxu0 0.0
    %344 = vmatpush1.msra.mxu0 0.0
    %345 = vmatprep.subr.mxu0 0.0
    %346 = vmatpush1.msra.mxu0 0.0
    %347 = vmatprep.subr.mxu0 0.0
    %348 = vmatpush1.msra.mxu0 0.0
    %349 = vmatprep.subr.mxu0 0.0
    %350 = vmatpush1.msra.mxu0 0.0
    %351 = vmatprep.subr.mxu0 0.0
    %352 = vmatpush1.msra.mxu0 0.0
    %353 = vmatprep.subr.mxu0 0.0
    %354 = vmatpush1.msra.mxu0 0.0
    %355 = vmatprep.subr.mxu0 0.0
    %356 = vmatpush1.msra.mxu0 0.0
    %357 = vmatprep.subr.mxu0 0.0
    %358 = vmatpush1.msra.mxu0 0.0
    %359 = vmatprep.subr.mxu0 0.0
    %360 = vmatpush1.msra.mxu0 0.0
    %361 = vmatprep.subr.mxu0 0.0
    %362 = vmatpush1.msra.mxu0 %v148
    %363 = vmatprep.subr.mxu0 0.0
    %364 = vmatpush1.msra.mxu0 %v147
    %365 = vmatprep.subr.mxu0 0.0
    %366 = vmatpush1.msra.mxu0 %v146
    %367 = vmatprep.subr.mxu0 0.0
    %368 = vmatpush1.msra.mxu0 %v145
    %369 = vmatprep.subr.mxu0 0.0
    %370 = vmatpush2.msra.mxu0 0.0
    %371 = vmatprep.subr.mxu0 0.0
    %372 = vmatpush2.msra.mxu0 0.0
    %373 = vmatprep.subr.mxu0 0.0
    %374 = vmatpush2.msra.mxu0 0.0
    %375 = vmatprep.subr.mxu0 0.0
    %376 = vmatpush2.msra.mxu0 0.0
    %377 = vmatprep.subr.mxu0 0.0
    %378 = vmatpush2.msra.mxu0 0.0
    %379 = vmatprep.subr.mxu0 0.0
    %380 = vmatpush2.msra.mxu0 0.0
    %381 = vmatprep.subr.mxu0 0.0
    %382 = vmatpush2.msra.mxu0 0.0
    %383 = vmatprep.subr.mxu0 0.0
    %384 = vmatpush2.msra.mxu0 0.0
    %385 = vmatprep.subr.mxu0 0.0
    %386 = vmatpush2.msra.mxu0 0.0
    %387 = vmatprep.subr.mxu0 0.0
    %388 = vmatpush2.msra.mxu0 0.0
    %389 = vmatprep.subr.mxu0 0.0
    %390 = vmatpush2.msra.mxu0 0.0
    %391 = vmatprep.subr.mxu0 0.0
    %392 = vmatpush2.msra.mxu0 0.0
    %393 = vmatprep.subr.mxu0 0.0
    %394 = vmatpush2.msra.mxu0 0.0
    %395 = vmatprep.subr.mxu0 0.0
    %396 = vmatpush2.msra.mxu0 0.0
    %397 = vmatprep.subr.mxu0 0.0
    %398 = vmatpush2.msra.mxu0 0.0
    %399 = vmatprep.subr.mxu0 0.0
    %400 = vmatpush2.msra.mxu0 0.0
    %401 = vmatprep.mubr.f32.mxu0 0.0
    %402 = vmatmul.mubr.f32.gmra.mxu0 %v335
    %v403 = vpop.f32.mrf.mxu0
    %v404 = vadd.f32 0.0, %v403
    %v405 = vpop.f32.mrf.mxu0
    %406 = vdwg.mxu0
    %v408 = vrot.slane %v404, 6
    %v409 = vrot.slane %v404, 7
    %v412 = vadd.f32 %v137, %v408
    %v413 = vadd.f32 %v142, %v409
    %v414 = vxor.u32 %v412, 2147483648
    %v415 = vxor.u32 %v413, 2147483648
    %v416 = vmul.f32 %v414, 1.442695
    %v417 = vpow.pop %v416
    %v418 = vmul.f32 %v415, 1.442695
    %v419 = vpow.pop %v418
    %v420 = vadd.f32 %v417, 1.0
    %v421 = vadd.f32 %v419, 1.0
    %v422 = vrcp.pop %v420
    %v423 = vmul.f32 1.0, %v422
    %v424 = vrcp.pop %v421
    %v425 = vmul.f32 1.0, %v424
    %v426 = vtanh.pop %v412
    %v427 = vtanh.pop %v413
    %v430 = vrot.slane %v315, 7
    %v431 = vrot.slane %v316, 7
    %v434 = vmul.f32 %v423, %v430
    %v435 = vmul.f32 %v425, %v431
    %438 = vrot.lane.b32.xlu0 %v426, 32
    %v439 = vpop.permute.xlu0 %438
    %440 = vrot.lane.b32.xlu0 %v427, 32
    %v441 = vpop.permute.xlu0 %440
    %v444 = vmul.f32 %v423, %v439
    %v445 = vmul.f32 %v425, %v441
    %448 = vrot.lane.b32.xlu0 %v444, 32
    %v449 = vpop.permute.xlu0 %448
    %450 = vrot.lane.b32.xlu0 %v445, 32
    %v451 = vpop.permute.xlu0 %450
    %v454 = vadd.f32 %v434, %v449
    %v455 = vadd.f32 %v435, %v451
    %v456 = vtanh.pop %v454
    %v457 = vtanh.pop %v455
    %460 = vrot.lane.b32.xlu0 %v456, 32
    %v461 = vpop.permute.xlu0 %460
    %462 = vrot.lane.b32.xlu0 %v457, 32
    %v463 = vpop.permute.xlu0 %462
    %v466 = vmul.f32 %v423, %v461
    %v467 = vmul.f32 %v425, %v463
    %v470 = vrot.slane %v466, 2
    %v471 = vrot.slane %v467, 1
    %v472 = vsel %vm188, %v471, %v470
    %473 = vrot.lane.b32.xlu0 %v472, 64
    %v474 = vpop.permute.xlu0 %473
    %v475 = vsel %vm192, %v474, 0
    %477 = vmatprep.subr.mxu0 0.0
    %478 = vmatpush1.msra.mxu0 0.0
    %479 = vmatprep.subr.mxu0 0.0
    %480 = vmatpush1.msra.mxu0 0.0
    %481 = vmatprep.subr.mxu0 0.0
    %482 = vmatpush1.msra.mxu0 0.0
    %483 = vmatprep.subr.mxu0 0.0
    %484 = vmatpush1.msra.mxu0 0.0
    %485 = vmatprep.subr.mxu0 0.0
    %486 = vmatpush1.msra.mxu0 0.0
    %487 = vmatprep.subr.mxu0 0.0
    %488 = vmatpush1.msra.mxu0 0.0
    %489 = vmatprep.subr.mxu0 0.0
    %490 = vmatpush1.msra.mxu0 0.0
    %491 = vmatprep.subr.mxu0 0.0
    %492 = vmatpush1.msra.mxu0 0.0
    %493 = vmatprep.subr.mxu0 0.0
    %494 = vmatpush1.msra.mxu0 0.0
    %495 = vmatprep.subr.mxu0 0.0
    %496 = vmatpush1.msra.mxu0 0.0
    %497 = vmatprep.subr.mxu0 0.0
    %498 = vmatpush1.msra.mxu0 0.0
    %499 = vmatprep.subr.mxu0 0.0
    %500 = vmatpush1.msra.mxu0 0.0
    %501 = vmatprep.subr.mxu0 0.0
    %502 = vmatpush1.msra.mxu0 %v148
    %503 = vmatprep.subr.mxu0 0.0
    %504 = vmatpush1.msra.mxu0 %v147
    %505 = vmatprep.subr.mxu0 0.0
    %506 = vmatpush1.msra.mxu0 %v146
    %507 = vmatprep.subr.mxu0 0.0
    %508 = vmatpush1.msra.mxu0 %v145
    %509 = vmatprep.subr.mxu0 0.0
    %510 = vmatpush2.msra.mxu0 0.0
    %511 = vmatprep.subr.mxu0 0.0
    %512 = vmatpush2.msra.mxu0 0.0
    %513 = vmatprep.subr.mxu0 0.0
    %514 = vmatpush2.msra.mxu0 0.0
    %515 = vmatprep.subr.mxu0 0.0
    %516 = vmatpush2.msra.mxu0 0.0
    %517 = vmatprep.subr.mxu0 0.0
    %518 = vmatpush2.msra.mxu0 0.0
    %519 = vmatprep.subr.mxu0 0.0
    %520 = vmatpush2.msra.mxu0 0.0
    %521 = vmatprep.subr.mxu0 0.0
    %522 = vmatpush2.msra.mxu0 0.0
    %523 = vmatprep.subr.mxu0 0.0
    %524 = vmatpush2.msra.mxu0 0.0
    %525 = vmatprep.subr.mxu0 0.0
    %526 = vmatpush2.msra.mxu0 0.0
    %527 = vmatprep.subr.mxu0 0.0
    %528 = vmatpush2.msra.mxu0 0.0
    %529 = vmatprep.subr.mxu0 0.0
    %530 = vmatpush2.msra.mxu0 0.0
    %531 = vmatprep.subr.mxu0 0.0
    %532 = vmatpush2.msra.mxu0 0.0
    %533 = vmatprep.subr.mxu0 0.0
    %534 = vmatpush2.msra.mxu0 0.0
    %535 = vmatprep.subr.mxu0 0.0
    %536 = vmatpush2.msra.mxu0 0.0
    %537 = vmatprep.subr.mxu0 0.0
    %538 = vmatpush2.msra.mxu0 0.0
    %539 = vmatprep.subr.mxu0 0.0
    %540 = vmatpush2.msra.mxu0 0.0
    %541 = vmatprep.mubr.f32.mxu0 0.0
    %542 = vmatmul.mubr.f32.gmra.mxu0 %v475
    %v543 = vpop.f32.mrf.mxu0
    %v544 = vadd.f32 0.0, %v543
    %v545 = vpop.f32.mrf.mxu0
    %546 = vdwg.mxu0
    %v548 = vrot.slane %v544, 5
    %v549 = vrot.slane %v544, 6
    %v552 = vadd.f32 %v137, %v548
    %v553 = vadd.f32 %v142, %v549
    %v554 = vxor.u32 %v552, 2147483648
    %v555 = vxor.u32 %v553, 2147483648
    %v556 = vmul.f32 %v554, 1.442695
    %v557 = vpow.pop %v556
    %v558 = vmul.f32 %v555, 1.442695
    %v559 = vpow.pop %v558
    %v560 = vadd.f32 %v557, 1.0
    %v561 = vadd.f32 %v559, 1.0
    %v562 = vrcp.pop %v560
    %v563 = vmul.f32 1.0, %v562
    %v564 = vrcp.pop %v561
    %v565 = vmul.f32 1.0, %v564
    %v566 = vtanh.pop %v552
    %v567 = vtanh.pop %v553
    %v570 = vrot.slane %v454, 7
    %v571 = vrot.slane %v455, 7
    %v574 = vmul.f32 %v563, %v570
    %v575 = vmul.f32 %v565, %v571
    %578 = vrot.lane.b32.xlu0 %v566, 32
    %v579 = vpop.permute.xlu0 %578
    %580 = vrot.lane.b32.xlu0 %v567, 32
    %v581 = vpop.permute.xlu0 %580
    %v584 = vmul.f32 %v563, %v579
    %v585 = vmul.f32 %v565, %v581
    %588 = vrot.lane.b32.xlu0 %v584, 32
    %v589 = vpop.permute.xlu0 %588
    %590 = vrot.lane.b32.xlu0 %v585, 32
    %v591 = vpop.permute.xlu0 %590
    %v594 = vadd.f32 %v574, %v589
    %v595 = vadd.f32 %v575, %v591
    %v596 = vtanh.pop %v594
    %v597 = vtanh.pop %v595
    %600 = vrot.lane.b32.xlu0 %v596, 32
    %v601 = vpop.permute.xlu0 %600
    %602 = vrot.lane.b32.xlu0 %v597, 32
    %v603 = vpop.permute.xlu0 %602
    %v606 = vmul.f32 %v563, %v601
    %v607 = vmul.f32 %v565, %v603
    %v610 = vrot.slane %v606, 3
    %v611 = vrot.slane %v607, 2
    %v612 = vsel %vm188, %v611, %v610
    %613 = vrot.lane.b32.xlu0 %v612, 64
    %v614 = vpop.permute.xlu0 %613
    %v615 = vsel %vm192, %v614, 0
    %617 = vmatprep.subr.mxu0 0.0
    %618 = vmatpush1.msra.mxu0 0.0
    %619 = vmatprep.subr.mxu0 0.0
    %620 = vmatpush1.msra.mxu0 0.0
    %621 = vmatprep.subr.mxu0 0.0
    %622 = vmatpush1.msra.mxu0 0.0
    %623 = vmatprep.subr.mxu0 0.0
    %624 = vmatpush1.msra.mxu0 0.0
    %625 = vmatprep.subr.mxu0 0.0
    %626 = vmatpush1.msra.mxu0 0.0
    %627 = vmatprep.subr.mxu0 0.0
    %628 = vmatpush1.msra.mxu0 0.0
    %629 = vmatprep.subr.mxu0 0.0
    %630 = vmatpush1.msra.mxu0 0.0
    %631 = vmatprep.subr.mxu0 0.0
    %632 = vmatpush1.msra.mxu0 0.0
    %633 = vmatprep.subr.mxu0 0.0
    %634 = vmatpush1.msra.mxu0 0.0
    %635 = vmatprep.subr.mxu0 0.0
    %636 = vmatpush1.msra.mxu0 0.0
    %637 = vmatprep.subr.mxu0 0.0
    %638 = vmatpush1.msra.mxu0 0.0
    %639 = vmatprep.subr.mxu0 0.0
    %640 = vmatpush1.msra.mxu0 0.0
    %641 = vmatprep.subr.mxu0 0.0
    %642 = vmatpush1.msra.mxu0 %v148
    %643 = vmatprep.subr.mxu0 0.0
    %644 = vmatpush1.msra.mxu0 %v147
    %645 = vmatprep.subr.mxu0 0.0
    %646 = vmatpush1.msra.mxu0 %v146
    %647 = vmatprep.subr.mxu0 0.0
    %648 = vmatpush1.msra.mxu0 %v145
    %649 = vmatprep.subr.mxu0 0.0
    %650 = vmatpush2.msra.mxu0 0.0
    %651 = vmatprep.subr.mxu0 0.0
    %652 = vmatpush2.msra.mxu0 0.0
    %653 = vmatprep.subr.mxu0 0.0
    %654 = vmatpush2.msra.mxu0 0.0
    %655 = vmatprep.subr.mxu0 0.0
    %656 = vmatpush2.msra.mxu0 0.0
    %657 = vmatprep.subr.mxu0 0.0
    %658 = vmatpush2.msra.mxu0 0.0
    %659 = vmatprep.subr.mxu0 0.0
    %660 = vmatpush2.msra.mxu0 0.0
    %661 = vmatprep.subr.mxu0 0.0
    %662 = vmatpush2.msra.mxu0 0.0
    %663 = vmatprep.subr.mxu0 0.0
    %664 = vmatpush2.msra.mxu0 0.0
    %665 = vmatprep.subr.mxu0 0.0
    %666 = vmatpush2.msra.mxu0 0.0
    %667 = vmatprep.subr.mxu0 0.0
    %668 = vmatpush2.msra.mxu0 0.0
    %669 = vmatprep.subr.mxu0 0.0
    %670 = vmatpush2.msra.mxu0 0.0
    %671 = vmatprep.subr.mxu0 0.0
    %672 = vmatpush2.msra.mxu0 0.0
    %673 = vmatprep.subr.mxu0 0.0
    %674 = vmatpush2.msra.mxu0 0.0
    %675 = vmatprep.subr.mxu0 0.0
    %676 = vmatpush2.msra.mxu0 0.0
    %677 = vmatprep.subr.mxu0 0.0
    %678 = vmatpush2.msra.mxu0 0.0
    %679 = vmatprep.subr.mxu0 0.0
    %680 = vmatpush2.msra.mxu0 0.0
    %681 = vmatprep.mubr.f32.mxu0 0.0
    %682 = vmatmul.mubr.f32.gmra.mxu0 %v615
    %v683 = vpop.f32.mrf.mxu0
    %v684 = vadd.f32 0.0, %v683
    %v685 = vpop.f32.mrf.mxu0
    %686 = vdwg.mxu0
    %v688 = vrot.slane %v684, 4
    %v689 = vrot.slane %v684, 5
    %v692 = vadd.f32 %v137, %v688
    %v693 = vadd.f32 %v142, %v689
    %v694 = vxor.u32 %v692, 2147483648
    %v695 = vxor.u32 %v693, 2147483648
    %v696 = vmul.f32 %v694, 1.442695
    %v697 = vpow.pop %v696
    %v698 = vmul.f32 %v695, 1.442695
    %v699 = vpow.pop %v698
    %v700 = vadd.f32 %v697, 1.0
    %v701 = vadd.f32 %v699, 1.0
    %v702 = vrcp.pop %v700
    %v703 = vmul.f32 1.0, %v702
    %v704 = vrcp.pop %v701
    %v705 = vmul.f32 1.0, %v704
    %v706 = vtanh.pop %v692
    %v707 = vtanh.pop %v693
    %v710 = vrot.slane %v594, 7
    %v711 = vrot.slane %v595, 7
    %v714 = vmul.f32 %v703, %v710
    %v715 = vmul.f32 %v705, %v711
    %718 = vrot.lane.b32.xlu0 %v706, 32
    %v719 = vpop.permute.xlu0 %718
    %720 = vrot.lane.b32.xlu0 %v707, 32
    %v721 = vpop.permute.xlu0 %720
    %v724 = vmul.f32 %v703, %v719
    %v725 = vmul.f32 %v705, %v721
    %728 = vrot.lane.b32.xlu0 %v724, 32
    %v729 = vpop.permute.xlu0 %728
    %730 = vrot.lane.b32.xlu0 %v725, 32
    %v731 = vpop.permute.xlu0 %730
    %v734 = vadd.f32 %v714, %v729
    %v735 = vadd.f32 %v715, %v731
    %v736 = vtanh.pop %v734
    %v737 = vtanh.pop %v735
    %740 = vrot.lane.b32.xlu0 %v736, 32
    %v741 = vpop.permute.xlu0 %740
    %742 = vrot.lane.b32.xlu0 %v737, 32
    %v743 = vpop.permute.xlu0 %742
    %v746 = vmul.f32 %v703, %v741
    %v747 = vmul.f32 %v705, %v743
    %v750 = vrot.slane %v746, 4
    %v751 = vrot.slane %v747, 3
    %v752 = vsel %vm188, %v751, %v750
    %753 = vrot.lane.b32.xlu0 %v752, 64
    %v754 = vpop.permute.xlu0 %753
    %v755 = vsel %vm192, %v754, 0
    %757 = vmatprep.subr.mxu0 0.0
    %758 = vmatpush1.msra.mxu0 0.0
    %759 = vmatprep.subr.mxu0 0.0
    %760 = vmatpush1.msra.mxu0 0.0
    %761 = vmatprep.subr.mxu0 0.0
    %762 = vmatpush1.msra.mxu0 0.0
    %763 = vmatprep.subr.mxu0 0.0
    %764 = vmatpush1.msra.mxu0 0.0
    %765 = vmatprep.subr.mxu0 0.0
    %766 = vmatpush1.msra.mxu0 0.0
    %767 = vmatprep.subr.mxu0 0.0
    %768 = vmatpush1.msra.mxu0 0.0
    %769 = vmatprep.subr.mxu0 0.0
    %770 = vmatpush1.msra.mxu0 0.0
    %771 = vmatprep.subr.mxu0 0.0
    %772 = vmatpush1.msra.mxu0 0.0
    %773 = vmatprep.subr.mxu0 0.0
    %774 = vmatpush1.msra.mxu0 0.0
    %775 = vmatprep.subr.mxu0 0.0
    %776 = vmatpush1.msra.mxu0 0.0
    %777 = vmatprep.subr.mxu0 0.0
    %778 = vmatpush1.msra.mxu0 0.0
    %779 = vmatprep.subr.mxu0 0.0
    %780 = vmatpush1.msra.mxu0 0.0
    %781 = vmatprep.subr.mxu0 0.0
    %782 = vmatpush1.msra.mxu0 %v148
    %783 = vmatprep.subr.mxu0 0.0
    %784 = vmatpush1.msra.mxu0 %v147
    %785 = vmatprep.subr.mxu0 0.0
    %786 = vmatpush1.msra.mxu0 %v146
    %787 = vmatprep.subr.mxu0 0.0
    %788 = vmatpush1.msra.mxu0 %v145
    %789 = vmatprep.subr.mxu0 0.0
    %790 = vmatpush2.msra.mxu0 0.0
    %791 = vmatprep.subr.mxu0 0.0
    %792 = vmatpush2.msra.mxu0 0.0
    %793 = vmatprep.subr.mxu0 0.0
    %794 = vmatpush2.msra.mxu0 0.0
    %795 = vmatprep.subr.mxu0 0.0
    %796 = vmatpush2.msra.mxu0 0.0
    %797 = vmatprep.subr.mxu0 0.0
    %798 = vmatpush2.msra.mxu0 0.0
    %799 = vmatprep.subr.mxu0 0.0
    %800 = vmatpush2.msra.mxu0 0.0
    %801 = vmatprep.subr.mxu0 0.0
    %802 = vmatpush2.msra.mxu0 0.0
    %803 = vmatprep.subr.mxu0 0.0
    %804 = vmatpush2.msra.mxu0 0.0
    %805 = vmatprep.subr.mxu0 0.0
    %806 = vmatpush2.msra.mxu0 0.0
    %807 = vmatprep.subr.mxu0 0.0
    %808 = vmatpush2.msra.mxu0 0.0
    %809 = vmatprep.subr.mxu0 0.0
    %810 = vmatpush2.msra.mxu0 0.0
    %811 = vmatprep.subr.mxu0 0.0
    %812 = vmatpush2.msra.mxu0 0.0
    %813 = vmatprep.subr.mxu0 0.0
    %814 = vmatpush2.msra.mxu0 0.0
    %815 = vmatprep.subr.mxu0 0.0
    %816 = vmatpush2.msra.mxu0 0.0
    %817 = vmatprep.subr.mxu0 0.0
    %818 = vmatpush2.msra.mxu0 0.0
    %819 = vmatprep.subr.mxu0 0.0
    %820 = vmatpush2.msra.mxu0 0.0
    %821 = vmatprep.mubr.f32.mxu0 0.0
    %822 = vmatmul.mubr.f32.gmra.mxu0 %v755
    %v823 = vpop.f32.mrf.mxu0
    %v824 = vadd.f32 0.0, %v823
    %v825 = vpop.f32.mrf.mxu0
    %826 = vdwg.mxu0
    %v828 = vrot.slane %v824, 3
    %v829 = vrot.slane %v824, 4
    %v832 = vadd.f32 %v137, %v828
    %v833 = vadd.f32 %v142, %v829
    %v834 = vxor.u32 %v832, 2147483648
    %v835 = vxor.u32 %v833, 2147483648
    %v836 = vmul.f32 %v834, 1.442695
    %v837 = vpow.pop %v836
    %v838 = vmul.f32 %v835, 1.442695
    %v839 = vpow.pop %v838
    %v840 = vadd.f32 %v837, 1.0
    %v841 = vadd.f32 %v839, 1.0
    %v842 = vrcp.pop %v840
    %v843 = vmul.f32 1.0, %v842
    %v844 = vrcp.pop %v841
    %v845 = vmul.f32 1.0, %v844
    %v846 = vtanh.pop %v832
    %v847 = vtanh.pop %v833
    %v850 = vrot.slane %v734, 7
    %v851 = vrot.slane %v735, 7
    %v854 = vmul.f32 %v843, %v850
    %v855 = vmul.f32 %v845, %v851
    %858 = vrot.lane.b32.xlu0 %v846, 32
    %v859 = vpop.permute.xlu0 %858
    %860 = vrot.lane.b32.xlu0 %v847, 32
    %v861 = vpop.permute.xlu0 %860
    %v864 = vmul.f32 %v843, %v859
    %v865 = vmul.f32 %v845, %v861
    %868 = vrot.lane.b32.xlu0 %v864, 32
    %v869 = vpop.permute.xlu0 %868
    %870 = vrot.lane.b32.xlu0 %v865, 32
    %v871 = vpop.permute.xlu0 %870
    %v874 = vadd.f32 %v854, %v869
    %v875 = vadd.f32 %v855, %v871
    %v876 = vtanh.pop %v874
    %v877 = vtanh.pop %v875
    %880 = vrot.lane.b32.xlu0 %v876, 32
    %v881 = vpop.permute.xlu0 %880
    %882 = vrot.lane.b32.xlu0 %v877, 32
    %v883 = vpop.permute.xlu0 %882
    %v886 = vmul.f32 %v843, %v881
    %v887 = vmul.f32 %v845, %v883
    %v890 = vrot.slane %v886, 5
    %v891 = vrot.slane %v887, 4
    %v892 = vsel %vm188, %v891, %v890
    %893 = vrot.lane.b32.xlu0 %v892, 64
    %v894 = vpop.permute.xlu0 %893
    %v895 = vsel %vm192, %v894, 0
    %897 = vmatprep.subr.mxu0 0.0
    %898 = vmatpush1.msra.mxu0 0.0
    %899 = vmatprep.subr.mxu0 0.0
    %900 = vmatpush1.msra.mxu0 0.0
    %901 = vmatprep.subr.mxu0 0.0
    %902 = vmatpush1.msra.mxu0 0.0
    %903 = vmatprep.subr.mxu0 0.0
    %904 = vmatpush1.msra.mxu0 0.0
    %905 = vmatprep.subr.mxu0 0.0
    %906 = vmatpush1.msra.mxu0 0.0
    %907 = vmatprep.subr.mxu0 0.0
    %908 = vmatpush1.msra.mxu0 0.0
    %909 = vmatprep.subr.mxu0 0.0
    %910 = vmatpush1.msra.mxu0 0.0
    %911 = vmatprep.subr.mxu0 0.0
    %912 = vmatpush1.msra.mxu0 0.0
    %913 = vmatprep.subr.mxu0 0.0
    %914 = vmatpush1.msra.mxu0 0.0
    %915 = vmatprep.subr.mxu0 0.0
    %916 = vmatpush1.msra.mxu0 0.0
    %917 = vmatprep.subr.mxu0 0.0
    %918 = vmatpush1.msra.mxu0 0.0
    %919 = vmatprep.subr.mxu0 0.0
    %920 = vmatpush1.msra.mxu0 0.0
    %921 = vmatprep.subr.mxu0 0.0
    %922 = vmatpush1.msra.mxu0 %v148
    %923 = vmatprep.subr.mxu0 0.0
    %924 = vmatpush1.msra.mxu0 %v147
    %925 = vmatprep.subr.mxu0 0.0
    %926 = vmatpush1.msra.mxu0 %v146
    %927 = vmatprep.subr.mxu0 0.0
    %928 = vmatpush1.msra.mxu0 %v145
    %929 = vmatprep.subr.mxu0 0.0
    %930 = vmatpush2.msra.mxu0 0.0
    %931 = vmatprep.subr.mxu0 0.0
    %932 = vmatpush2.msra.mxu0 0.0
    %933 = vmatprep.subr.mxu0 0.0
    %934 = vmatpush2.msra.mxu0 0.0
    %935 = vmatprep.subr.mxu0 0.0
    %936 = vmatpush2.msra.mxu0 0.0
    %937 = vmatprep.subr.mxu0 0.0
    %938 = vmatpush2.msra.mxu0 0.0
    %939 = vmatprep.subr.mxu0 0.0
    %940 = vmatpush2.msra.mxu0 0.0
    %941 = vmatprep.subr.mxu0 0.0
    %942 = vmatpush2.msra.mxu0 0.0
    %943 = vmatprep.subr.mxu0 0.0
    %944 = vmatpush2.msra.mxu0 0.0
    %945 = vmatprep.subr.mxu0 0.0
    %946 = vmatpush2.msra.mxu0 0.0
    %947 = vmatprep.subr.mxu0 0.0
    %948 = vmatpush2.msra.mxu0 0.0
    %949 = vmatprep.subr.mxu0 0.0
    %950 = vmatpush2.msra.mxu0 0.0
    %951 = vmatprep.subr.mxu0 0.0
    %952 = vmatpush2.msra.mxu0 0.0
    %953 = vmatprep.subr.mxu0 0.0
    %954 = vmatpush2.msra.mxu0 0.0
    %955 = vmatprep.subr.mxu0 0.0
    %956 = vmatpush2.msra.mxu0 0.0
    %957 = vmatprep.subr.mxu0 0.0
    %958 = vmatpush2.msra.mxu0 0.0
    %959 = vmatprep.subr.mxu0 0.0
    %960 = vmatpush2.msra.mxu0 0.0
    %961 = vmatprep.mubr.f32.mxu0 0.0
    %962 = vmatmul.mubr.f32.gmra.mxu0 %v895
    %v963 = vpop.f32.mrf.mxu0
    %v964 = vadd.f32 0.0, %v963
    %v965 = vpop.f32.mrf.mxu0
    %966 = vdwg.mxu0
    %v968 = vrot.slane %v964, 2
    %v969 = vrot.slane %v964, 3
    %v972 = vadd.f32 %v137, %v968
    %v973 = vadd.f32 %v142, %v969
    %v974 = vxor.u32 %v972, 2147483648
    %v975 = vxor.u32 %v973, 2147483648
    %v976 = vmul.f32 %v974, 1.442695
    %v977 = vpow.pop %v976
    %v978 = vmul.f32 %v975, 1.442695
    %v979 = vpow.pop %v978
    %v980 = vadd.f32 %v977, 1.0
    %v981 = vadd.f32 %v979, 1.0
    %v982 = vrcp.pop %v980
    %v983 = vmul.f32 1.0, %v982
    %v984 = vrcp.pop %v981
    %v985 = vmul.f32 1.0, %v984
    %v986 = vtanh.pop %v972
    %v987 = vtanh.pop %v973
    %v990 = vrot.slane %v874, 7
    %v991 = vrot.slane %v875, 7
    %v994 = vmul.f32 %v983, %v990
    %v995 = vmul.f32 %v985, %v991
    %998 = vrot.lane.b32.xlu0 %v986, 32
    %v999 = vpop.permute.xlu0 %998
    %1000 = vrot.lane.b32.xlu0 %v987, 32
    %v1001 = vpop.permute.xlu0 %1000
    %v1004 = vmul.f32 %v983, %v999
    %v1005 = vmul.f32 %v985, %v1001
    %1008 = vrot.lane.b32.xlu0 %v1004, 32
    %v1009 = vpop.permute.xlu0 %1008
    %1010 = vrot.lane.b32.xlu0 %v1005, 32
    %v1011 = vpop.permute.xlu0 %1010
    %v1014 = vadd.f32 %v994, %v1009
    %v1015 = vadd.f32 %v995, %v1011
    %v1016 = vtanh.pop %v1014
    %v1017 = vtanh.pop %v1015
    %1020 = vrot.lane.b32.xlu0 %v1016, 32
    %v1021 = vpop.permute.xlu0 %1020
    %1022 = vrot.lane.b32.xlu0 %v1017, 32
    %v1023 = vpop.permute.xlu0 %1022
    %v1026 = vmul.f32 %v983, %v1021
    %v1027 = vmul.f32 %v985, %v1023
    %v1030 = vrot.slane %v1026, 6
    %v1031 = vrot.slane %v1027, 5
    %v1032 = vsel %vm188, %v1031, %v1030
    %1033 = vrot.lane.b32.xlu0 %v1032, 64
    %v1034 = vpop.permute.xlu0 %1033
    %v1035 = vsel %vm192, %v1034, 0
    %1037 = vmatprep.subr.mxu0 0.0
    %1038 = vmatpush1.msra.mxu0 0.0
    %1039 = vmatprep.subr.mxu0 0.0
    %1040 = vmatpush1.msra.mxu0 0.0
    %1041 = vmatprep.subr.mxu0 0.0
    %1042 = vmatpush1.msra.mxu0 0.0
    %1043 = vmatprep.subr.mxu0 0.0
    %1044 = vmatpush1.msra.mxu0 0.0
    %1045 = vmatprep.subr.mxu0 0.0
    %1046 = vmatpush1.msra.mxu0 0.0
    %1047 = vmatprep.subr.mxu0 0.0
    %1048 = vmatpush1.msra.mxu0 0.0
    %1049 = vmatprep.subr.mxu0 0.0
    %1050 = vmatpush1.msra.mxu0 0.0
    %1051 = vmatprep.subr.mxu0 0.0
    %1052 = vmatpush1.msra.mxu0 0.0
    %1053 = vmatprep.subr.mxu0 0.0
    %1054 = vmatpush1.msra.mxu0 0.0
    %1055 = vmatprep.subr.mxu0 0.0
    %1056 = vmatpush1.msra.mxu0 0.0
    %1057 = vmatprep.subr.mxu0 0.0
    %1058 = vmatpush1.msra.mxu0 0.0
    %1059 = vmatprep.subr.mxu0 0.0
    %1060 = vmatpush1.msra.mxu0 0.0
    %1061 = vmatprep.subr.mxu0 0.0
    %1062 = vmatpush1.msra.mxu0 %v148
    %1063 = vmatprep.subr.mxu0 0.0
    %1064 = vmatpush1.msra.mxu0 %v147
    %1065 = vmatprep.subr.mxu0 0.0
    %1066 = vmatpush1.msra.mxu0 %v146
    %1067 = vmatprep.subr.mxu0 0.0
    %1068 = vmatpush1.msra.mxu0 %v145
    %1069 = vmatprep.subr.mxu0 0.0
    %1070 = vmatpush2.msra.mxu0 0.0
    %1071 = vmatprep.subr.mxu0 0.0
    %1072 = vmatpush2.msra.mxu0 0.0
    %1073 = vmatprep.subr.mxu0 0.0
    %1074 = vmatpush2.msra.mxu0 0.0
    %1075 = vmatprep.subr.mxu0 0.0
    %1076 = vmatpush2.msra.mxu0 0.0
    %1077 = vmatprep.subr.mxu0 0.0
    %1078 = vmatpush2.msra.mxu0 0.0
    %1079 = vmatprep.subr.mxu0 0.0
    %1080 = vmatpush2.msra.mxu0 0.0
    %1081 = vmatprep.subr.mxu0 0.0
    %1082 = vmatpush2.msra.mxu0 0.0
    %1083 = vmatprep.subr.mxu0 0.0
    %1084 = vmatpush2.msra.mxu0 0.0
    %1085 = vmatprep.subr.mxu0 0.0
    %1086 = vmatpush2.msra.mxu0 0.0
    %1087 = vmatprep.subr.mxu0 0.0
    %1088 = vmatpush2.msra.mxu0 0.0
    %1089 = vmatprep.subr.mxu0 0.0
    %1090 = vmatpush2.msra.mxu0 0.0
    %1091 = vmatprep.subr.mxu0 0.0
    %1092 = vmatpush2.msra.mxu0 0.0
    %1093 = vmatprep.subr.mxu0 0.0
    %1094 = vmatpush2.msra.mxu0 0.0
    %1095 = vmatprep.subr.mxu0 0.0
    %1096 = vmatpush2.msra.mxu0 0.0
    %1097 = vmatprep.subr.mxu0 0.0
    %1098 = vmatpush2.msra.mxu0 0.0
    %1099 = vmatprep.subr.mxu0 0.0
    %1100 = vmatpush2.msra.mxu0 0.0
    %1101 = vmatprep.mubr.f32.mxu0 0.0
    %1102 = vmatmul.mubr.f32.gmra.mxu0 %v1035
    %v1103 = vpop.f32.mrf.mxu0
    %v1104 = vadd.f32 0.0, %v1103
    %v1105 = vpop.f32.mrf.mxu0
    %1106 = vdwg.mxu0
    %v1108 = vrot.slane %v1104, 1
    %v1109 = vrot.slane %v1104, 2
    %v1112 = vadd.f32 %v137, %v1108
    %v1113 = vadd.f32 %v142, %v1109
    %v1114 = vxor.u32 %v1112, 2147483648
    %v1115 = vxor.u32 %v1113, 2147483648
    %v1116 = vmul.f32 %v1114, 1.442695
    %v1117 = vpow.pop %v1116
    %v1118 = vmul.f32 %v1115, 1.442695
    %v1119 = vpow.pop %v1118
    %v1120 = vadd.f32 %v1117, 1.0
    %v1121 = vadd.f32 %v1119, 1.0
    %v1122 = vrcp.pop %v1120
    %v1123 = vmul.f32 1.0, %v1122
    %v1124 = vrcp.pop %v1121
    %v1125 = vmul.f32 1.0, %v1124
    %v1126 = vtanh.pop %v1112
    %v1127 = vtanh.pop %v1113
    %v1130 = vrot.slane %v1014, 7
    %v1131 = vrot.slane %v1015, 7
    %v1134 = vmul.f32 %v1123, %v1130
    %v1135 = vmul.f32 %v1125, %v1131
    %1138 = vrot.lane.b32.xlu0 %v1126, 32
    %v1139 = vpop.permute.xlu0 %1138
    %1140 = vrot.lane.b32.xlu0 %v1127, 32
    %v1141 = vpop.permute.xlu0 %1140
    %v1144 = vmul.f32 %v1123, %v1139
    %v1145 = vmul.f32 %v1125, %v1141
    %1148 = vrot.lane.b32.xlu0 %v1144, 32
    %v1149 = vpop.permute.xlu0 %1148
    %1150 = vrot.lane.b32.xlu0 %v1145, 32
    %v1151 = vpop.permute.xlu0 %1150
    %v1154 = vadd.f32 %v1134, %v1149
    %v1155 = vadd.f32 %v1135, %v1151
    %v1156 = vtanh.pop %v1154
    %v1157 = vtanh.pop %v1155
    %1160 = vrot.lane.b32.xlu0 %v1156, 32
    %v1161 = vpop.permute.xlu0 %1160
    %1162 = vrot.lane.b32.xlu0 %v1157, 32
    %v1163 = vpop.permute.xlu0 %1162
    %v1166 = vmul.f32 %v1123, %v1161
    %v1167 = vmul.f32 %v1125, %v1163
    %v1168 = vld [vmem:[%s4] sm:$0xff]
    %v1169 = vld [vmem:[%s4 + $0x8] sm:$0xff]
    %v1170 = vld [vmem:[%s4 + $0x10] sm:$0xff]
    %v1171 = vld [vmem:[%s4 + $0x18] sm:$0xff]
    %v1172 = vld [vmem:[%s5] sm:$0x1]
    %v1174 = vlaneseq
    %v1175 = vshrl.u32 %v1174, 7
    %v1176 = vsub.s32 0, %v1175
    %v1177 = vrot.slane %v1172, %v1176
    %v1181 = vrot.slane %v1166, 7
    %v1182 = vrot.slane %v1167, 6
    %v1183 = vsel %vm188, %v1182, %v1181
    %1184 = vrot.lane.b32.xlu0 %v1183, 64
    %v1185 = vpop.permute.xlu0 %1184
    %v1186 = vsel %vm192, %v1185, 0
    %1188 = vmatprep.subr.mxu0 0.0
    %1189 = vmatpush1.msra.mxu0 0.0
    %1190 = vmatprep.subr.mxu0 0.0
    %1191 = vmatpush1.msra.mxu0 0.0
    %1192 = vmatprep.subr.mxu0 0.0
    %1193 = vmatpush1.msra.mxu0 0.0
    %1194 = vmatprep.subr.mxu0 0.0
    %1195 = vmatpush1.msra.mxu0 0.0
    %1196 = vmatprep.subr.mxu0 0.0
    %1197 = vmatpush1.msra.mxu0 0.0
    %1198 = vmatprep.subr.mxu0 0.0
    %1199 = vmatpush1.msra.mxu0 0.0
    %1200 = vmatprep.subr.mxu0 0.0
    %1201 = vmatpush1.msra.mxu0 0.0
    %1202 = vmatprep.subr.mxu0 0.0
    %1203 = vmatpush1.msra.mxu0 0.0
    %1204 = vmatprep.subr.mxu0 0.0
    %1205 = vmatpush1.msra.mxu0 0.0
    %1206 = vmatprep.subr.mxu0 0.0
    %1207 = vmatpush1.msra.mxu0 0.0
    %1208 = vmatprep.subr.mxu0 0.0
    %1209 = vmatpush1.msra.mxu0 0.0
    %1210 = vmatprep.subr.mxu0 0.0
    %1211 = vmatpush1.msra.mxu0 0.0
    %1212 = vmatprep.subr.mxu0 0.0
    %1213 = vmatpush1.msra.mxu0 %v1171
    %1214 = vmatprep.subr.mxu0 0.0
    %1215 = vmatpush1.msra.mxu0 %v1170
    %1216 = vmatprep.subr.mxu0 0.0
    %1217 = vmatpush1.msra.mxu0 %v1169
    %1218 = vmatprep.subr.mxu0 0.0
    %1219 = vmatpush1.msra.mxu0 %v1168
    %1220 = vmatprep.subr.mxu0 0.0
    %1221 = vmatpush2.msra.mxu0 0.0
    %1222 = vmatprep.subr.mxu0 0.0
    %1223 = vmatpush2.msra.mxu0 0.0
    %1224 = vmatprep.subr.mxu0 0.0
    %1225 = vmatpush2.msra.mxu0 0.0
    %1226 = vmatprep.subr.mxu0 0.0
    %1227 = vmatpush2.msra.mxu0 0.0
    %1228 = vmatprep.subr.mxu0 0.0
    %1229 = vmatpush2.msra.mxu0 0.0
    %1230 = vmatprep.subr.mxu0 0.0
    %1231 = vmatpush2.msra.mxu0 0.0
    %1232 = vmatprep.subr.mxu0 0.0
    %1233 = vmatpush2.msra.mxu0 0.0
    %1234 = vmatprep.subr.mxu0 0.0
    %1235 = vmatpush2.msra.mxu0 0.0
    %1236 = vmatprep.subr.mxu0 0.0
    %1237 = vmatpush2.msra.mxu0 0.0
    %1238 = vmatprep.subr.mxu0 0.0
    %1239 = vmatpush2.msra.mxu0 0.0
    %1240 = vmatprep.subr.mxu0 0.0
    %1241 = vmatpush2.msra.mxu0 0.0
    %1242 = vmatprep.subr.mxu0 0.0
    %1243 = vmatpush2.msra.mxu0 0.0
    %1244 = vmatprep.subr.mxu0 0.0
    %1245 = vmatpush2.msra.mxu0 0.0
    %1246 = vmatprep.subr.mxu0 0.0
    %1247 = vmatpush2.msra.mxu0 0.0
    %1248 = vmatprep.subr.mxu0 0.0
    %1249 = vmatpush2.msra.mxu0 0.0
    %1250 = vmatprep.subr.mxu0 0.0
    %1251 = vmatpush2.msra.mxu0 0.0
    %1252 = vmatprep.mubr.f32.mxu0 0.0
    %1253 = vmatmul.mubr.f32.gmra.mxu0 %v1186
    %v1254 = vpop.f32.mrf.mxu0
    %v1255 = vadd.f32 %v1177, %v1254
    %v1256 = vpop.f32.mrf.mxu0
    %1257 = vdwg.mxu0
    %v1258 = vmax.f32 %v1255, 0.0
    %vm1259 = vcmask 25600
    %1260 = vst.msk [vmem:[#allocation7] sm:$0x3] %vm1259, %v1258
    // Predicated region
    $region34: #{tpu_custom_call.1} parent=1 // pred_check
      _
    $region35: #{tpu_custom_call.1} parent=1 // pred_check_branch
      %1262 = sbr.rel (0) target = $region37
    $region36: #{tpu_custom_call.1} parent=1 // pred_region
      %s1264 = ssub.s32 32, 32
      %1265 = vsyncadd [#allocation4], %s1264
      %s1267 = sshll.u32 [#allocation7], 4
      %s1268 = int_to_ptr.vmem [resolvable:$true] %s1267
      %1270 = dma.vmem_to_hbm [thread:$0]  %s1268, 32, %s6, [#allocation4]
    $region37: #{tpu_custom_call.1} parent=1 // pred_fallthru
      _
    // Predicated region
    $region38: #{tpu_custom_call.1} parent=1 // pred_check
      _
    $region39: #{tpu_custom_call.1} parent=1 // pred_check_branch
      %1272 = sbr.rel (0) target = $region41
    $region40: #{tpu_custom_call.1} parent=1 // pred_region
      %1273 = dma.done [#allocation4], 32
    $region41: #{tpu_custom_call.1} parent=1 // pred_fallthru
      _
    %1274 = vsyncpa [#allocation3], 1
    %1275 = vsyncpa [#allocation6], 1
    %1276 = vsyncpa [#allocation4], 1

</llo_original>
